<compile_context>
chip_gen: v5e
topology: v5e:2x2
jax: 0.10.0
libtpu: 0.0.40
codegen_flags: <defaults>
</compile_context>

<pallas_src>
import functools

import jax
import jax.numpy as jnp
from jax.experimental import pallas as pl
from jax.experimental.pallas import tpu as pltpu

_LANE = 128
# Elements per channel per block (f32 -> 512 KiB/channel -> ~1.5 MiB block).
_ELEMS_PER_CHAN_PER_BLOCK = 128 * 1024


def _preprocess_kernel(scale_ref, bias_ref, x_ref, o_ref, *, src):
    """y[c] = scale[c] * x[src[c]] + bias[c]  (per-pixel channel affine).

    scale_ref, bias_ref : (3,) f32 in SMEM
    x_ref, o_ref        : (1, 3, S, L) VMEM blocks (per-channel dense slabs)
    src                 : static channel permutation (reversed for BGR2RGB)
    """
    for c in range(3):
        xc = x_ref[0, src[c]].astype(jnp.float32)            # dense (S, L) slab
        o_ref[0, c] = (scale_ref[c] * xc + bias_ref[c]).astype(o_ref.dtype)


def make_preprocess_params(mean_value, std_value):
    """scale = 1/std, bias = -mean/std, exactly as the PyTorch __init__."""
    if isinstance(mean_value, (int, float)):
        mean_value = [mean_value] * 3
    if isinstance(std_value, (int, float)):
        std_value = [std_value] * 3
    assert len(mean_value) == 3 and len(std_value) == 3
    scale = jnp.array([1.0 / s for s in std_value], dtype=jnp.float32)
    bias = jnp.array([-m / s for m, s in zip(mean_value, std_value)],
                     dtype=jnp.float32)
    return scale, bias


def _pick_row_tile(rows, lanes):
    """Sublane-row tile: multiple of 32 (valid for u8/bf16/f32 packing) or full."""
    t = max(_ELEMS_PER_CHAN_PER_BLOCK // max(lanes, 1), 32)
    t = (t // 32) * 32
    if t >= rows:
        return rows          # full extent is always a legal block dim
    return t


@functools.partial(jax.jit, static_argnames=("bgr2rgb", "out_dtype"))
def preprocess_conv_layer_forward(x_nchw, scale, bias, *, bgr2rgb=False,
                                  out_dtype=jnp.float32):
    """x_nchw: (N, 3, H, W), any of uint8 / bf16 / f32 -> (N, 3, H, W) out_dtype."""
    N, C, H, W = x_nchw.shape
    assert C == 3
    P = H * W

    # Lane-dense view with zero host-side copies:
    #  * H*W % 128 == 0: flatten to (rows, 128)  -> fully packed lanes
    #  * otherwise: keep (H, W)                  -> no pad/slice HBM passes; the
    #    ragged lane tail only costs masked boundary stores (VPU/VMEM waste).
    if P % _LANE == 0:
        R, L = P // _LANE, _LANE
    else:
        R, L = H, W
    x = x_nchw.reshape(N, C, R, L)           # free metadata reshape (contiguous)

    tr = _pick_row_tile(R, L)
    n_tiles = pl.cdiv(R, tr)

    kernel = functools.partial(
        _preprocess_kernel, src=(2, 1, 0) if bgr2rgb else (0, 1, 2))

    in_bytes = x.size * jnp.dtype(x.dtype).itemsize
    out_bytes = N * C * R * L * jnp.dtype(out_dtype).itemsize

    out = pl.pallas_call(
        kernel,
        out_shape=jax.ShapeDtypeStruct((N, C, R, L), out_dtype),
        grid_spec=pltpu.PrefetchScalarGridSpec(
            num_scalar_prefetch=0,
            grid=(N, n_tiles),
            in_specs=[
                pl.BlockSpec(memory_space=pltpu.MemorySpace.SMEM),   # scale (3,)
                pl.BlockSpec(memory_space=pltpu.MemorySpace.SMEM),   # bias  (3,)
                pl.BlockSpec((1, C, tr, L), lambda n, t: (n, 0, t, 0)),
            ],
            out_specs=pl.BlockSpec((1, C, tr, L), lambda n, t: (n, 0, t, 0)),
        ),
        # Both axes independent; on v7x the spatial-tile axis can carry the
        # 2-TensorCore split (consider pltpu.CORE_PARALLEL there if a trace
        # shows a single core streaming).
        compiler_params=pltpu.CompilerParams(
            dimension_semantics=("parallel", "parallel")),
        cost_estimate=pl.CostEstimate(flops=2 * N * C * R * L,
                                      transcendentals=0,
                                      bytes_accessed=in_bytes + out_bytes),
    )(scale, bias, x)

    return out.reshape(N, C, H, W)            # free metadata reshape


def _reference(x, scale, bias, bgr2rgb):
    src = (2, 1, 0) if bgr2rgb else (0, 1, 2)
    xf = x.astype(jnp.float32)
    return jnp.stack([scale[c] * xf[:, src[c]] + bias[c] for c in range(3)],
                     axis=1)


if __name__ == "__main__":
    key = jax.random.PRNGKey(0)
    mean_value = [123.675, 116.28, 103.53]
    std_value = [58.395, 57.12, 57.375]
    scale, bias = make_preprocess_params(mean_value, std_value)

    # (shape, bgr2rgb, input dtype, out dtype, atol)
    cases = [
        ((2, 3, 16, 16), False, jnp.float32, jnp.float32, 1e-4),   # lane-aligned path
        ((1, 3, 17, 15), True,  jnp.uint8,   jnp.float32, 1e-4),   # ragged (H,W) path
        ((1, 3, 20, 12), False, jnp.uint8,   jnp.bfloat16, 3e-2),  # bf16 writeback
    ]
    for shape, bgr2rgb, in_dtype, out_dtype, atol in cases:
        key, sub = jax.random.split(key)
        if in_dtype == jnp.uint8:
            x = jax.random.randint(sub, shape, 0, 256, dtype=jnp.int32).astype(jnp.uint8)
        else:
            x = jax.random.uniform(sub, shape, dtype=jnp.float32) * 255.0

        out = jax.block_until_ready(
            preprocess_conv_layer_forward(x, scale, bias,
                                          bgr2rgb=bgr2rgb, out_dtype=out_dtype))
        ref = _reference(x, scale, bias, bgr2rgb)
        assert out.shape == x.shape and out.dtype == jnp.dtype(out_dtype)
        assert jnp.allclose(out.astype(jnp.float32), ref, atol=atol, rtol=1e-3), \
            f"mismatch for {shape}, bgr2rgb={bgr2rgb}"

    print("KERNEL_OK")
</pallas_src>

<mosaic_0001>
module attributes {stable_mosaic.version = 11 : i64} {
  func.func @_preprocess_kernel(%arg0: i32, %arg1: i32, %arg2: memref<3xf32, #tpu.memory_space<smem>>, %arg3: memref<3xf32, #tpu.memory_space<smem>>, %arg4: memref<1x3x2x128xf32, #tpu.memory_space<vmem>>, %arg5: memref<1x3x2x128xf32, #tpu.memory_space<vmem>>) attributes {dimension_semantics = [#tpu.dimension_semantics<parallel>, #tpu.dimension_semantics<parallel>], iteration_bounds = array<i64: 2, 1>, scalar_prefetch = 0 : i64, scratch_operands = 0 : i64, tpu.core_type = #tpu.core_type<tc>, window_params = [{transform_indices = @transform_0, window_bounds = array<i64: 3>}, {transform_indices = @transform_1, window_bounds = array<i64: 3>}, {transform_indices = @transform_2, window_bounds = array<i64: 1, 3, 2, 128>}, {transform_indices = @transform_3, window_bounds = array<i64: 1, 3, 2, 128>}]} {
    %c0 = arith.constant 0 : index
    %c0_0 = arith.constant 0 : index
    %c0_1 = arith.constant 0 : index
    %c0_2 = arith.constant 0 : index
    %0 = vector.load %arg4[%c0, %c0_0, %c0_1, %c0_2] : memref<1x3x2x128xf32, #tpu.memory_space<vmem>>, vector<1x1x2x128xf32>
    %1 = vector.shape_cast %0 : vector<1x1x2x128xf32> to vector<2x128xf32>
    %c0_3 = arith.constant 0 : index
    %2 = memref.load %arg2[%c0_3] : memref<3xf32, #tpu.memory_space<smem>>
    %3 = vector.broadcast %2 : f32 to vector<2x128xf32>
    %4 = arith.mulf %3, %1 : vector<2x128xf32>
    %c0_4 = arith.constant 0 : index
    %5 = memref.load %arg3[%c0_4] : memref<3xf32, #tpu.memory_space<smem>>
    %6 = vector.broadcast %5 : f32 to vector<2x128xf32>
    %7 = arith.addf %4, %6 : vector<2x128xf32>
    %c0_5 = arith.constant 0 : index
    %c0_6 = arith.constant 0 : index
    %c0_7 = arith.constant 0 : index
    %c0_8 = arith.constant 0 : index
    %8 = vector.load %arg5[%c0_5, %c0_6, %c0_7, %c0_8] : memref<1x3x2x128xf32, #tpu.memory_space<vmem>>, vector<1x1x2x128xf32>
    %9 = vector.shape_cast %8 : vector<1x1x2x128xf32> to vector<2x128xf32>
    %10 = vector.shape_cast %7 : vector<2x128xf32> to vector<1x1x2x128xf32>
    tpu.vector_store %arg5[%c0_5, %c0_6, %c0_7, %c0_8], %10 {strides = array<i32>} : memref<1x3x2x128xf32, #tpu.memory_space<vmem>>, vector<1x1x2x128xf32>,
    %c0_9 = arith.constant 0 : index
    %c1 = arith.constant 1 : index
    %c0_10 = arith.constant 0 : index
    %c0_11 = arith.constant 0 : index
    %11 = vector.load %arg4[%c0_9, %c1, %c0_10, %c0_11] : memref<1x3x2x128xf32, #tpu.memory_space<vmem>>, vector<1x1x2x128xf32>
    %12 = vector.shape_cast %11 : vector<1x1x2x128xf32> to vector<2x128xf32>
    %c1_12 = arith.constant 1 : index
    %13 = memref.load %arg2[%c1_12] : memref<3xf32, #tpu.memory_space<smem>>
    %14 = vector.broadcast %13 : f32 to vector<2x128xf32>
    %15 = arith.mulf %14, %12 : vector<2x128xf32>
    %c1_13 = arith.constant 1 : index
    %16 = memref.load %arg3[%c1_13] : memref<3xf32, #tpu.memory_space<smem>>
    %17 = vector.broadcast %16 : f32 to vector<2x128xf32>
    %18 = arith.addf %15, %17 : vector<2x128xf32>
    %c0_14 = arith.constant 0 : index
    %c1_15 = arith.constant 1 : index
    %c0_16 = arith.constant 0 : index
    %c0_17 = arith.constant 0 : index
    %19 = vector.load %arg5[%c0_14, %c1_15, %c0_16, %c0_17] : memref<1x3x2x128xf32, #tpu.memory_space<vmem>>, vector<1x1x2x128xf32>
    %20 = vector.shape_cast %19 : vector<1x1x2x128xf32> to vector<2x128xf32>
    %21 = vector.shape_cast %18 : vector<2x128xf32> to vector<1x1x2x128xf32>
    tpu.vector_store %arg5[%c0_14, %c1_15, %c0_16, %c0_17], %21 {strides = array<i32>} : memref<1x3x2x128xf32, #tpu.memory_space<vmem>>, vector<1x1x2x128xf32>,
    %c0_18 = arith.constant 0 : index
    %c2 = arith.constant 2 : index
    %c0_19 = arith.constant 0 : index
    %c0_20 = arith.constant 0 : index
    %22 = vector.load %arg4[%c0_18, %c2, %c0_19, %c0_20] : memref<1x3x2x128xf32, #tpu.memory_space<vmem>>, vector<1x1x2x128xf32>
    %23 = vector.shape_cast %22 : vector<1x1x2x128xf32> to vector<2x128xf32>
    %c2_21 = arith.constant 2 : index
    %24 = memref.load %arg2[%c2_21] : memref<3xf32, #tpu.memory_space<smem>>
    %25 = vector.broadcast %24 : f32 to vector<2x128xf32>
    %26 = arith.mulf %25, %23 : vector<2x128xf32>
    %c2_22 = arith.constant 2 : index
    %27 = memref.load %arg3[%c2_22] : memref<3xf32, #tpu.memory_space<smem>>
    %28 = vector.broadcast %27 : f32 to vector<2x128xf32>
    %29 = arith.addf %26, %28 : vector<2x128xf32>
    %c0_23 = arith.constant 0 : index
    %c2_24 = arith.constant 2 : index
    %c0_25 = arith.constant 0 : index
    %c0_26 = arith.constant 0 : index
    %30 = vector.load %arg5[%c0_23, %c2_24, %c0_25, %c0_26] : memref<1x3x2x128xf32, #tpu.memory_space<vmem>>, vector<1x1x2x128xf32>
    %31 = vector.shape_cast %30 : vector<1x1x2x128xf32> to vector<2x128xf32>
    %32 = vector.shape_cast %29 : vector<2x128xf32> to vector<1x1x2x128xf32>
    tpu.vector_store %arg5[%c0_23, %c2_24, %c0_25, %c0_26], %32 {strides = array<i32>} : memref<1x3x2x128xf32, #tpu.memory_space<vmem>>, vector<1x1x2x128xf32>,
    return
  }
  func.func @transform_0(%arg0: i32, %arg1: i32) -> i32 {
    %c0_i32 = arith.constant 0 : i32
    %c0_i32_0 = arith.constant 0 : i32
    return %c0_i32 : i32
  }
  func.func @transform_1(%arg0: i32, %arg1: i32) -> i32 {
    %c0_i32 = arith.constant 0 : i32
    %c0_i32_0 = arith.constant 0 : i32
    return %c0_i32 : i32
  }
  func.func @transform_2(%arg0: i32, %arg1: i32) -> (i32, i32, i32, i32) {
    %c0_i32 = arith.constant 0 : i32
    %c0_i32_0 = arith.constant 0 : i32
    %c0_i32_1 = arith.constant 0 : i32
    return %arg0, %c0_i32, %arg1, %c0_i32_0 : i32, i32, i32, i32
  }
  func.func @transform_3(%arg0: i32, %arg1: i32) -> (i32, i32, i32, i32) {
    %c0_i32 = arith.constant 0 : i32
    %c0_i32_0 = arith.constant 0 : i32
    %c0_i32_1 = arith.constant 0 : i32
    return %arg0, %c0_i32, %arg1, %c0_i32_0 : i32, i32, i32, i32
  }
}

</mosaic_0001>

<llo_original>
// kernel: preprocess_conv_layer_forward.1
$region0: #{preprocess_conv_layer_forward.1}
  #allocation0 [shape = 'u32[]', space=smem, size = 0x4, offset = 0x4, fixed_abs, tag = 'smem constant byte address 0x4 - core index']
  #allocation1 [shape = 'u32[72,128]{1,0:T(1,128)}', space=vmem, size = 0x9000, scoped, tag = 'internal scratch']
  %s0 = inlined_call_operand.vmem [shape: f32[3], index: 0, kind: input, shape index: {}]
  %s1 = inlined_call_operand.vmem [shape: f32[3], index: 1, kind: input, shape index: {}]
  %s2 = inlined_call_operand.vmem [shape: f32[2,3,2,128], index: 2, kind: input, shape index: {}]
  %s3 = inlined_call_operand.vmem [shape: f32[2,3,2,128], index: 3, kind: output, shape index: {}]
  %s4 = sld [smem:[#allocation0]]
  $region53: #{preprocess_conv_layer_forward.1} parent=0
    _
  %s6 = ssub.s32 1, %s4
  %s7 = scalar_select 0, %s6, %s4
  $region1: #{preprocess_conv_layer_forward.1} parent=0
    #allocation2 [shape = 'u8[512]{0}', space=smem, size = 0x200, scoped, tag = 'input window, operand 0, single buffered']
    #allocation3 [shape = 's32[2]{0}', space=sflag, size = 0x8, scoped, tag = 'scoped memory for preprocess_conv_layer_forward.1']
    #allocation4 [shape = 'u8[512]{0}', space=smem, size = 0x200, scoped, tag = 'input window, operand 1, single buffered']
    #allocation5 [shape = 's32[1]{0}', space=sflag, size = 0x4, scoped, tag = 'scoped memory for preprocess_conv_layer_forward.1']
    %8 = vsyncpa [#allocation3], 0
    %9 = vsyncpa [#allocation5], 0
    loop: start=0, step=1, limit=4
    $region2: #{preprocess_conv_layer_forward.1} parent=1 // loop_pre_header
      _
    $region3: #{preprocess_conv_layer_forward.1} parent=1 // loop_header
      %s11 = sphi 0, %s15
      %p12 = scmp.ge.s32.totalorder %s11, 4
      %s18 = sphi 0, %s30
      %s19 = sphi 0, %s26
      %s20 = sphi 0, %s18
      %s21 = sphi 0, %s19
      %s22 = sphi 0, %s20
      %s23 = sphi 0, %s21
      %s31 = sphi 0, %s31
      %s33 = sphi 0, %s31
      %s34 = sphi 0, %s33
      %s48 = sphi 0, %s34
      %s52 = sphi 0, %s52
      %s54 = sphi 0, %s52
      %s55 = sphi 0, %s54
      %s69 = sphi 0, %s55
      %s77 = sphi 0, %s79
      %s80 = sphi 0, %s77
      %s81 = sphi 0, %s80
      %s97 = sphi 0, %s81
      %s105 = sphi 0, %s107
      %s108 = sphi 0, %s105
      %s109 = sphi 0, %s108
      %s125 = sphi 0, %s109
    $region4: #{preprocess_conv_layer_forward.1} parent=1 // loop_header_branch
      %14 = sbr.rel (%p12) target = $region8
    $region5: #{preprocess_conv_layer_forward.1} parent=1 // loop_body
      %s16 = ssub.s32 %s11, 1
      %s17 = ssub.s32 %s11, 2
      %s24 = sadd.s32 1, %s19
      %p25 = scmp.ge.s32.totalorder %s24, 1
      %s26 = scalar_select %p25, 0, %s24
      %s27 = sadd.s32 1, %s18
      %s28 = scalar_select %p25, %s27, %s18
      %p29 = scmp.ge.s32.totalorder %s28, 2
      %s30 = scalar_select %p29, 0, %s28
      %s32 = sadd.s32 %s31, 1
      %p35 = scmp.eq.s32.totalorder %s11, 1
      %p36 = scmp.ne.s32.totalorder %s31, %s33
      %p37 = scmp.eq.s32.totalorder %s11, 0
      %p38 = por %p36, %p37
      %p39 = scmp.ne.s32.totalorder %s31, %s33
      %p40 = scmp.eq.s32.totalorder %s16, 1
      %p41 = por %p39, %p40
      %p42 = scmp.ne.s32.totalorder %s33, %s34
      %p43 = scmp.eq.s32.totalorder %s16, 0
      %p44 = por %p42, %p43
      %p45 = scmp.ne.s32.totalorder %s33, %s34
      %p46 = scmp.eq.s32.totalorder %s17, 1
      %p47 = por %p45, %p46
      %p49 = scmp.ne.s32.totalorder %s34, %s48
      %p50 = scmp.eq.s32.totalorder %s17, 0
      %p51 = por %p49, %p50
      %s53 = sadd.s32 %s52, 1
      %p56 = scmp.eq.s32.totalorder %s11, 1
      %p57 = scmp.ne.s32.totalorder %s52, %s54
      %p58 = scmp.eq.s32.totalorder %s11, 0
      %p59 = por %p57, %p58
      %p60 = scmp.ne.s32.totalorder %s52, %s54
      %p61 = scmp.eq.s32.totalorder %s16, 1
      %p62 = por %p60, %p61
      %p63 = scmp.ne.s32.totalorder %s54, %s55
      %p64 = scmp.eq.s32.totalorder %s16, 0
      %p65 = por %p63, %p64
      %p66 = scmp.ne.s32.totalorder %s54, %s55
      %p67 = scmp.eq.s32.totalorder %s17, 1
      %p68 = por %p66, %p67
      %p70 = scmp.ne.s32.totalorder %s55, %s69
      %p71 = scmp.eq.s32.totalorder %s17, 0
      %p72 = por %p70, %p71
      %s73 = ssub.s32 %s18, %s30
      %s74 = ssub.s32 %s19, %s26
      %s75 = sor.u32 %s73, %s74
      %p76 = scmp.eq.s32.totalorder %s75, 0
      %s78 = sadd.s32 %s77, 1
      %s79 = scalar_select %p76, %s77, %s78
      %p82 = pneg %p76
      %p83 = scmp.eq.s32.totalorder %s11, 1
      %p84 = por %p82, %p83
      %p85 = scmp.ne.s32.totalorder %s77, %s80
      %p86 = scmp.eq.s32.totalorder %s11, 0
      %p87 = por %p85, %p86
      %p88 = scmp.ne.s32.totalorder %s77, %s80
      %p89 = scmp.eq.s32.totalorder %s16, 1
      %p90 = por %p88, %p89
      %p91 = scmp.ne.s32.totalorder %s80, %s81
      %p92 = scmp.eq.s32.totalorder %s16, 0
      %p93 = por %p91, %p92
      %p94 = scmp.ne.s32.totalorder %s80, %s81
      %p95 = scmp.eq.s32.totalorder %s17, 1
      %p96 = por %p94, %p95
      %p98 = scmp.ne.s32.totalorder %s81, %s97
      %p99 = scmp.eq.s32.totalorder %s17, 0
      %p100 = por %p98, %p99
      %s101 = ssub.s32 %s18, %s30
      %s102 = ssub.s32 %s19, %s26
      %s103 = sor.u32 %s101, %s102
      %p104 = scmp.eq.s32.totalorder %s103, 0
      %s106 = sadd.s32 %s105, 1
      %s107 = scalar_select %p104, %s105, %s106
      %p110 = pneg %p104
      %p111 = scmp.eq.s32.totalorder %s11, 1
      %p112 = por %p110, %p111
      %p113 = scmp.ne.s32.totalorder %s105, %s108
      %p114 = scmp.eq.s32.totalorder %s11, 0
      %p115 = por %p113, %p114
      %p116 = scmp.ne.s32.totalorder %s105, %s108
      %p117 = scmp.eq.s32.totalorder %s16, 1
      %p118 = por %p116, %p117
      %p119 = scmp.ne.s32.totalorder %s108, %s109
      %p120 = scmp.eq.s32.totalorder %s16, 0
      %p121 = por %p119, %p120
      %p122 = scmp.ne.s32.totalorder %s108, %s109
      %p123 = scmp.eq.s32.totalorder %s17, 1
      %p124 = por %p122, %p123
      %p126 = scmp.ne.s32.totalorder %s109, %s125
      %p127 = scmp.eq.s32.totalorder %s17, 0
      %p128 = por %p126, %p127
      %p129 = scmp.le.s32.totalorder 1, %s11
      %p130 = scmp.lt.s32.totalorder %s11, 3
      %p131 = pnand %p129, %p130
      %p132 = pneg %p131
      // Predicated region
      $region9: #{preprocess_conv_layer_forward.1} parent=5 // pred_check
        _
      $region10: #{preprocess_conv_layer_forward.1} parent=5 // pred_check_branch
        %134 = sbr.rel (%p131) target = $region12
      $region11: #{preprocess_conv_layer_forward.1} parent=5 // pred_region
        %s135 = ssub.s32 %s11, 1
        // Predicated region
        $region13: #{preprocess_conv_layer_forward.1} parent=11 // pred_check
          %p136 = pneg %p44
        $region14: #{preprocess_conv_layer_forward.1} parent=11 // pred_check_branch
          %138 = sbr.rel (%p136) target = $region16
        $region15: #{preprocess_conv_layer_forward.1} parent=11 // pred_region
          %140 = vsyncadd [#allocation3], 0
          %s142 = sshll.u32 %s0, 4
          %s143 = int_to_ptr.vmem [resolvable:$true] %s142
          %145 = dma.vmem_to_smem %s143, 16, [#allocation2], [#allocation3]
        $region16: #{preprocess_conv_layer_forward.1} parent=11 // pred_fallthru
          _
        // Predicated region
        $region17: #{preprocess_conv_layer_forward.1} parent=11 // pred_check
          %p146 = pneg %p65
        $region18: #{preprocess_conv_layer_forward.1} parent=11 // pred_check_branch
          %148 = sbr.rel (%p146) target = $region20
        $region19: #{preprocess_conv_layer_forward.1} parent=11 // pred_region
          %150 = vsyncadd [#allocation5], 0
          %s152 = sshll.u32 %s1, 4
          %s153 = int_to_ptr.vmem [resolvable:$true] %s152
          %155 = dma.vmem_to_smem %s153, 16, [#allocation4], [#allocation5]
        $region20: #{preprocess_conv_layer_forward.1} parent=11 // pred_fallthru
          _
      $region12: #{preprocess_conv_layer_forward.1} parent=5 // pred_fallthru
        _
      %p156 = scmp.lt.s32.totalorder %s11, 2
      // Predicated region
      $region21: #{preprocess_conv_layer_forward.1} parent=5 // pred_check
        %p157 = pneg %p156
      $region22: #{preprocess_conv_layer_forward.1} parent=5 // pred_check_branch
        %159 = sbr.rel (%p157) target = $region24
      $region23: #{preprocess_conv_layer_forward.1} parent=5 // pred_region
        // Predicated region
        $region25: #{preprocess_conv_layer_forward.1} parent=23 // pred_check
          %p160 = pneg %p87
        $region26: #{preprocess_conv_layer_forward.1} parent=23 // pred_check_branch
          %162 = sbr.rel (%p160) target = $region28
        $region27: #{preprocess_conv_layer_forward.1} parent=23 // pred_region
          %p163 = scmp.lt.s32.totalorder %s18, 1
          %s164 = scalar_select %p163, %s18, 1
          %p165 = scmp.lt.s32.totalorder %s19, 0
          %s166 = scalar_select %p165, %s19, 0
          %s167 = smul.addr %s164, 3
          %s168 = sadd.s32 %s166, %s167
          %s169 = smul.addr %s168, 2
          %s170 = scalar_lea.vmem %s2, %s169
        $region28: #{preprocess_conv_layer_forward.1} parent=23 // pred_fallthru
          _
      $region24: #{preprocess_conv_layer_forward.1} parent=5 // pred_fallthru
        _
      %p171 = scmp.le.s32.totalorder 1, %s11
      %p172 = scmp.lt.s32.totalorder %s11, 3
      %p173 = pnand %p171, %p172
      %p174 = pneg %p173
      // Predicated region
      $region29: #{preprocess_conv_layer_forward.1} parent=5 // pred_check
        _
      $region30: #{preprocess_conv_layer_forward.1} parent=5 // pred_check_branch
        %176 = sbr.rel (%p173) target = $region32
      $region31: #{preprocess_conv_layer_forward.1} parent=5 // pred_region
        %s177 = ssub.s32 %s11, 1
        // Predicated region
        $region33: #{preprocess_conv_layer_forward.1} parent=31 // pred_check
          %p178 = pneg %p44
        $region34: #{preprocess_conv_layer_forward.1} parent=31 // pred_check_branch
          %180 = sbr.rel (%p178) target = $region36
        $region35: #{preprocess_conv_layer_forward.1} parent=31 // pred_region
          %182 = dma.done [#allocation3], 16
        $region36: #{preprocess_conv_layer_forward.1} parent=31 // pred_fallthru
          _
        // Predicated region
        $region37: #{preprocess_conv_layer_forward.1} parent=31 // pred_check
          %p183 = pneg %p65
        $region38: #{preprocess_conv_layer_forward.1} parent=31 // pred_check_branch
          %185 = sbr.rel (%p183) target = $region40
        $region39: #{preprocess_conv_layer_forward.1} parent=31 // pred_region
          %187 = dma.done [#allocation5], 16
        $region40: #{preprocess_conv_layer_forward.1} parent=31 // pred_fallthru
          _
        %188 = sfence
        %p189 = pneg %p44
        %p190 = pneg %p41
        %p191 = pneg %p65
        %p192 = pneg %p62
        %p193 = scmp.lt.s32.totalorder %s20, 1
        %s194 = scalar_select %p193, %s20, 1
        %p195 = scmp.lt.s32.totalorder %s21, 0
        %s196 = scalar_select %p195, %s21, 0
        %s197 = smul.addr %s194, 3
        %s198 = sadd.s32 %s196, %s197
        %s199 = smul.addr %s198, 2
        %s200 = scalar_lea.vmem %s2, %s199
        %p201 = pneg %p93
        %p202 = pneg %p90
        %p203 = pneg %p121
        %p204 = pneg %p118
        %p205 = scmp.lt.s32.totalorder %s20, 1
        %s206 = scalar_select %p205, %s20, 1
        %p207 = scmp.lt.s32.totalorder %s21, 0
        %s208 = scalar_select %p207, %s21, 0
        %s209 = smul.addr %s206, 3
        %s210 = sadd.s32 %s208, %s209
        %s211 = smul.addr %s210, 2
        %s212 = scalar_lea.vmem %s3, %s211
        %p213 = scmp.lt.s32.totalorder %s20, 1
        %s214 = scalar_select %p213, %s20, 1
        %p215 = scmp.lt.s32.totalorder %s21, 0
        %s216 = scalar_select %p215, %s21, 0
        %s217 = smul.addr %s214, 3
        %s218 = sadd.s32 %s216, %s217
        %s219 = smul.addr %s218, 2
        %s220 = scalar_lea.vmem %s2, %s219
        %p221 = scmp.lt.s32.totalorder %s20, 1
        %s222 = scalar_select %p221, %s20, 1
        %p223 = scmp.lt.s32.totalorder %s21, 0
        %s224 = scalar_select %p223, %s21, 0
        %s225 = smul.addr %s222, 3
        %s226 = sadd.s32 %s224, %s225
        %s227 = smul.addr %s226, 2
        %s228 = scalar_lea.vmem %s3, %s227
        %v229 = vld [vmem:[%s220] sm:$0x3]
        %s230 = sld [smem:[#allocation2]]
        %v231 = vstv %s230
        %v232 = vmul.f32 %v231, %v229
        %s233 = sld [smem:[#allocation4]]
        %v234 = vstv %s233
        %v235 = vadd.f32 %v232, %v234
        %236 = vst [vmem:[%s228] sm:$0x3] %v235
        %s237 = scalar_lea.vmem %s220, 2
        %v238 = vld [vmem:[%s237] sm:$0x3]
        %s239 = sld [smem:[#allocation2 + $0x1]]
        %v240 = vstv %s239
        %v241 = vmul.f32 %v240, %v238
        %s242 = sld [smem:[#allocation4 + $0x1]]
        %v243 = vstv %s242
        %v244 = vadd.f32 %v241, %v243
        %s245 = scalar_lea.vmem %s228, 2
        %246 = vst [vmem:[%s245] sm:$0x3] %v244
        %s247 = scalar_lea.vmem %s220, 4
        %v248 = vld [vmem:[%s247] sm:$0x3]
        %s249 = sld [smem:[#allocation2 + $0x2]]
        %v250 = vstv %s249
        %v251 = vmul.f32 %v250, %v248
        %s252 = sld [smem:[#allocation4 + $0x2]]
        %v253 = vstv %s252
        %v254 = vadd.f32 %v251, %v253
        %s255 = scalar_lea.vmem %s228, 4
        %256 = vst [vmem:[%s255] sm:$0x3] %v254
        %p257 = scmp.lt.s32.totalorder %s20, 1
        %s258 = scalar_select %p257, %s20, 1
        %p259 = scmp.lt.s32.totalorder %s21, 0
        %s260 = scalar_select %p259, %s21, 0
        %s261 = smul.addr %s258, 3
        %s262 = sadd.s32 %s260, %s261
        %s263 = smul.addr %s262, 2
        %s264 = scalar_lea.vmem %s3, %s263
        // Predicated region
        $region41: #{preprocess_conv_layer_forward.1} parent=31 // pred_check
          %p265 = pneg %p118
        $region42: #{preprocess_conv_layer_forward.1} parent=31 // pred_check_branch
          %267 = sbr.rel (%p265) target = $region44
        $region43: #{preprocess_conv_layer_forward.1} parent=31 // pred_region
          _
        $region44: #{preprocess_conv_layer_forward.1} parent=31 // pred_fallthru
          _
      $region32: #{preprocess_conv_layer_forward.1} parent=5 // pred_fallthru
        _
      %p268 = scmp.le.s32.totalorder 2, %s11
      // Predicated region
      $region45: #{preprocess_conv_layer_forward.1} parent=5 // pred_check
        %p269 = pneg %p268
      $region46: #{preprocess_conv_layer_forward.1} parent=5 // pred_check_branch
        %271 = sbr.rel (%p269) target = $region48
      $region47: #{preprocess_conv_layer_forward.1} parent=5 // pred_region
        %s272 = ssub.s32 %s11, 2
        // Predicated region
        $region49: #{preprocess_conv_layer_forward.1} parent=47 // pred_check
          %p273 = pneg %p124
        $region50: #{preprocess_conv_layer_forward.1} parent=47 // pred_check_branch
          %275 = sbr.rel (%p273) target = $region52
        $region51: #{preprocess_conv_layer_forward.1} parent=47 // pred_region
          %p276 = scmp.lt.s32.totalorder %s22, 1
          %s277 = scalar_select %p276, %s22, 1
          %p278 = scmp.lt.s32.totalorder %s23, 0
          %s279 = scalar_select %p278, %s23, 0
          %s280 = smul.addr %s277, 3
          %s281 = sadd.s32 %s279, %s280
          %s282 = smul.addr %s281, 2
          %s283 = scalar_lea.vmem %s3, %s282
        $region52: #{preprocess_conv_layer_forward.1} parent=47 // pred_fallthru
          _
      $region48: #{preprocess_conv_layer_forward.1} parent=5 // pred_fallthru
        _
    $region6: #{preprocess_conv_layer_forward.1} parent=1 // loop_footer
      %s15 = sadd.s32 1, %s11
    $region7: #{preprocess_conv_layer_forward.1} parent=1 // loop_footer_branch
      %10 = sbr.rel target = $region3
    $region8: #{preprocess_conv_layer_forward.1} parent=1 // loop_exit
      _
    %284 = vsyncpa [#allocation3], 1
    %s285 = scalar_lea.sflag [#allocation3], 1
    %286 = vsyncpa %s285, 1
    %287 = vsyncpa [#allocation5], 1

</llo_original>
